<compile_context>
chip_gen: v7x
topology: tpu7x:2x2x1
jax: 0.10.0
libtpu: 0.0.40
codegen_flags: <defaults>
</compile_context>

<pallas_src>
import math

import jax
import jax.numpy as jnp
from jax import lax
from jax.experimental import pallas as pl
from jax.experimental.pallas import tpu as pltpu


_TM_ALIGN = 256          # multiple of 256 (v6e/v7x MXU) and of 128 (v5e MXU)
_H_CHUNK = 2048          # in-kernel f32 upcast chunk along H (multiple of 256)


def _align_down(x, m):
    return (x // m) * m


def _align_up(x, m):
    return ((x + m - 1) // m) * m


def _cdiv(a, b):
    return -(-a // b)


def _vmem_capacity_bytes():
    """Per-core VMEM capacity; conservative fallback if the query is unavailable."""
    try:
        info = pltpu.get_tpu_info()
        cap = getattr(info, "vmem_capacity_bytes", None)
        if cap:
            return int(cap)
    except Exception:
        pass
    return 64 << 20  # v7x per-TC capacity == most conservative supported chip


def _choose_tm(M, H, N_pad, x_itemsize, out_itemsize, h_chunk, tile_budget, tm_max):
    """Largest row tile whose full VMEM footprint (incl. f32 cast temp) fits budget."""
    if M <= _TM_ALIGN:
        return M  # full-extent block along M is always legal

    hc = min(H, h_chunk)
    w_bytes = 2 * N_pad * H * 4                # weight, conservatively double-buffered
    per_row = (2 * H * x_itemsize              # x tile, double-buffered by pipeline
               + hc * 4                        # f32 upcast temp (bounded by H chunking)
               + N_pad * 4                     # f32 accumulator / dot result
               + 2 * N_pad * out_itemsize)     # out tile, double-buffered
    avail = max(tile_budget - w_bytes, per_row * 8)
    tm = min(avail // per_row, tm_max, M)
    if tm >= _TM_ALIGN:
        tm = _align_down(tm, _TM_ALIGN)
    else:
        # Budget-constrained (very large H): align to the dtype's sublane packing.
        sub = 8 * max(1, 4 // max(1, x_itemsize))   # 8 (f32), 16 (bf16), 32 (int8/fp8)
        tm = max(_align_down(tm, sub), sub)
    return int(tm)


def _make_kernel(h_chunk):
    def kernel(x_ref, w_ref, o_ref):
        # x_ref: (tm, H) input dtype (e.g. bf16)
        # w_ref: (N_pad, H) float32, resident across the grid
        # o_ref: (tm, N_pad) output dtype (bf16), lane-dense
        H = x_ref.shape[1]
        dims = (((1,), (1,)), ((), ()))        # x @ w.T
        if H <= h_chunk:
            x = x_ref[...].astype(jnp.float32)       # hiddens.to(weight.dtype)
            acc = lax.dot_general(x, w_ref[...], dims,
                                  preferred_element_type=jnp.float32)
        else:
            n_full = H // h_chunk
            rem = H - n_full * h_chunk

            def body(c, acc):
                start = pl.multiple_of(c * h_chunk, h_chunk)
                xk = x_ref[:, pl.ds(start, h_chunk)].astype(jnp.float32)
                wk = w_ref[:, pl.ds(start, h_chunk)]
                return acc + lax.dot_general(xk, wk, dims,
                                             preferred_element_type=jnp.float32)

            acc = jnp.zeros((x_ref.shape[0], w_ref.shape[0]), jnp.float32)
            acc = lax.fori_loop(0, n_full, body, acc)
            if rem > 0:
                xk = x_ref[:, n_full * h_chunk:].astype(jnp.float32)
                wk = w_ref[:, n_full * h_chunk:]
                acc = acc + lax.dot_general(xk, wk, dims,
                                            preferred_element_type=jnp.float32)
        o_ref[...] = acc.astype(o_ref.dtype)         # .to(self.output_dtype)

    return kernel


def auto_casting_score(hiddens, weight, *, output_dtype=jnp.bfloat16,
                       tm=None, h_chunk=_H_CHUNK):
    """hiddens: [..., H]; weight: [N, H] -> [..., N] in output_dtype (bf16)."""
    *lead, H = hiddens.shape
    N, Hw = weight.shape
    assert H == Hw, "feature dim mismatch"
    M = math.prod(lead) if lead else 1
    x2d = hiddens.reshape(M, H)

    # Module stores the score weight in float32.
    w32 = weight.astype(jnp.float32)
    # Lane-dense output: pad the head to a multiple of 128 output rows with zeros.
    N_pad = _align_up(max(N, 1), 128)
    if N_pad != N:
        w32 = jnp.pad(w32, ((0, N_pad - N), (0, 0)))

    x_itemsize = x2d.dtype.itemsize
    out_itemsize = jnp.dtype(output_dtype).itemsize

    # Generation-aware VMEM budgets.
    vmem_cap = _vmem_capacity_bytes()                   # 64 MiB (v7x) / 128 MiB (v5e/v6e)
    vmem_cap_limit = (vmem_cap * 3) // 4                # ~48 MiB / ~96 MiB
    tile_budget = max(vmem_cap_limit - (8 << 20), 8 << 20)
    tm_max = 2048 if vmem_cap <= (64 << 20) else 4096

    if tm is None:
        tm_eff = _choose_tm(M, H, N_pad, x_itemsize, out_itemsize,
                            h_chunk, tile_budget, tm_max)
    else:
        tm_eff = max(1, min(int(tm), M))
    steps = _cdiv(M, tm_eff)

    # v7x (heuristic: 64 MiB/TC) shards the "parallel" axis across 2 TensorCores;
    # prefer an even grid there.  Single-TC chips skip this (it would only add steps).
    if tm is None and steps > 1 and steps % 2 == 1 and vmem_cap <= (64 << 20):
        cand = _align_up(_cdiv(M, steps + 1), _TM_ALIGN)
        if cand >= _TM_ALIGN and _cdiv(M, cand) % 2 == 0:
            tm_eff = cand
            steps = _cdiv(M, tm_eff)
    grid = (steps,)

    # Raise the scoped-VMEM limit past the 16/32 MiB defaults, capped at ~3/4 of
    # physical VMEM so Mosaic keeps scratch headroom.
    hc = min(H, h_chunk)
    needed = (2 * tm_eff * H * x_itemsize            # x double buffer
              + 2 * N_pad * H * 4                    # weight (conservatively x2)
              + tm_eff * hc * 4                      # f32 upcast temp
              + tm_eff * N_pad * 4                   # f32 accumulator
              + 2 * tm_eff * N_pad * out_itemsize)   # out double buffer
    vmem_limit = int(min(vmem_cap_limit, max(needed + (4 << 20), 32 << 20)))

    cost = pl.CostEstimate(
        flops=2 * M * N_pad * H,
        transcendentals=0,
        bytes_accessed=M * H * x_itemsize + N_pad * H * 4 + M * N_pad * out_itemsize,
    )

    out2d = pl.pallas_call(
        _make_kernel(h_chunk),
        out_shape=jax.ShapeDtypeStruct((M, N_pad), output_dtype),
        grid_spec=pltpu.PrefetchScalarGridSpec(
            num_scalar_prefetch=0,
            grid=grid,
            in_specs=[
                pl.BlockSpec((tm_eff, H), lambda i: (i, 0)),    # row tile of hiddens
                pl.BlockSpec((N_pad, H), lambda i: (0, 0)),     # padded weight, resident
            ],
            out_specs=pl.BlockSpec((tm_eff, N_pad), lambda i: (i, 0)),
        ),
        compiler_params=pltpu.CompilerParams(
            dimension_semantics=("parallel",),
            vmem_limit_bytes=vmem_limit,
        ),
        cost_estimate=cost,
    )(x2d, w32)

    out2d = out2d[:, :N] if N_pad != N else out2d
    return out2d.reshape(*lead, N)


def _reference(hiddens, weight, output_dtype=jnp.bfloat16):
    x = hiddens.astype(jnp.float32)
    out = jnp.einsum("...k,nk->...n", x, weight.astype(jnp.float32),
                     preferred_element_type=jnp.float32)
    return out.astype(output_dtype)


if __name__ == "__main__":
    key = jax.random.PRNGKey(0)
    k_x, k_w, k_x2, k_w2, k_x3, k_w3 = jax.random.split(key, 6)

    # --- Small shapes consistent with the module: batch=2, seq=8, hidden=32, labels=4.
    B, S, H, N = 2, 8, 32, 4
    hiddens = jax.random.normal(k_x, (B, S, H), dtype=jnp.float32).astype(jnp.bfloat16)
    weight = jax.random.normal(k_w, (N, H), dtype=jnp.float32) * 0.02

    out = jax.block_until_ready(auto_casting_score(hiddens, weight))
    ref = _reference(hiddens, weight)
    assert out.shape == (B, S, N), out.shape
    assert out.dtype == jnp.bfloat16, out.dtype
    assert jnp.allclose(out.astype(jnp.float32), ref.astype(jnp.float32),
                        atol=1e-2, rtol=1e-2)

    # --- Tiled / ragged-M path (multi-step grid, partial last block).
    B2, S2, H2, N2 = 3, 400, 256, 5
    hiddens2 = jax.random.normal(k_x2, (B2, S2, H2), dtype=jnp.float32).astype(jnp.bfloat16)
    weight2 = jax.random.normal(k_w2, (N2, H2), dtype=jnp.float32) * 0.02

    out2 = jax.block_until_ready(auto_casting_score(hiddens2, weight2, tm=256))
    ref2 = _reference(hiddens2, weight2)
    assert out2.shape == (B2, S2, N2), out2.shape
    assert out2.dtype == jnp.bfloat16, out2.dtype
    assert jnp.allclose(out2.astype(jnp.float32), ref2.astype(jnp.float32),
                        atol=1e-2, rtol=1e-2)

    # --- Exercise the in-kernel H-chunked cast path (fori_loop + static remainder)
    #     at small scale by shrinking h_chunk below H.
    B3, S3, H3, N3 = 2, 8, 320, 4
    hiddens3 = jax.random.normal(k_x3, (B3, S3, H3), dtype=jnp.float32).astype(jnp.bfloat16)
    weight3 = jax.random.normal(k_w3, (N3, H3), dtype=jnp.float32) * 0.02

    out3 = jax.block_until_ready(auto_casting_score(hiddens3, weight3, h_chunk=128))
    ref3 = _reference(hiddens3, weight3)
    assert out3.shape == (B3, S3, N3), out3.shape
    assert out3.dtype == jnp.bfloat16, out3.dtype
    assert jnp.allclose(out3.astype(jnp.float32), ref3.astype(jnp.float32),
                        atol=1e-2, rtol=1e-2)

    print("KERNEL_OK")
</pallas_src>

<mosaic_0001>
module attributes {stable_mosaic.version = 11 : i64} {
  func.func @kernel(%arg0: i32, %arg1: memref<16x32xbf16, #tpu.memory_space<vmem>>, %arg2: memref<128x32xf32, #tpu.memory_space<vmem>>, %arg3: memref<16x128xbf16, #tpu.memory_space<vmem>>) attributes {dimension_semantics = [#tpu.dimension_semantics<parallel>], iteration_bounds = array<i64: 1>, scalar_prefetch = 0 : i64, scratch_operands = 0 : i64, tpu.core_type = #tpu.core_type<tc>, window_params = [{transform_indices = @transform_0, window_bounds = array<i64: 16, 32>}, {pipeline_mode = #tpu.pipeline_mode<synchronous>, transform_indices = @transform_1, window_bounds = array<i64: 128, 32>}, {transform_indices = @transform_2, window_bounds = array<i64: 16, 128>}]} {
    %c0 = arith.constant 0 : index
    %c0_0 = arith.constant 0 : index
    %0 = vector.load %arg1[%c0, %c0_0] : memref<16x32xbf16, #tpu.memory_space<vmem>>, vector<16x32xbf16>
    %1 = arith.extf %0 : vector<16x32xbf16> to vector<16x32xf32>
    %c0_1 = arith.constant 0 : index
    %c0_2 = arith.constant 0 : index
    %2 = vector.load %arg2[%c0_1, %c0_2] : memref<128x32xf32, #tpu.memory_space<vmem>>, vector<128x32xf32>
    %cst = arith.constant dense<0.000000e+00> : vector<16x128xf32>
    %3 = tpu.matmul %1, %2, %cst {dimension_numbers = #tpu.dot_dimension_numbers<[1], [1], [0], [0], [0, 0, 1, 0], [], []>} : vector<16x32xf32>, vector<128x32xf32>, vector<16x128xf32> -> vector<16x128xf32>
    %4 = arith.truncf %3 : vector<16x128xf32> to vector<16x128xbf16>
    %c0_3 = arith.constant 0 : index
    %c0_4 = arith.constant 0 : index
    %5 = vector.load %arg3[%c0_3, %c0_4] : memref<16x128xbf16, #tpu.memory_space<vmem>>, vector<16x128xbf16>
    tpu.vector_store %arg3[%c0_3, %c0_4], %4 {strides = array<i32>} : memref<16x128xbf16, #tpu.memory_space<vmem>>, vector<16x128xbf16>,
    return
  }
  func.func @transform_0(%arg0: i32) -> (i32, i32) {
    %c0_i32 = arith.constant 0 : i32
    %c0_i32_0 = arith.constant 0 : i32
    return %arg0, %c0_i32 : i32, i32
  }
  func.func @transform_1(%arg0: i32) -> (i32, i32) {
    %c0_i32 = arith.constant 0 : i32
    %c0_i32_0 = arith.constant 0 : i32
    %c0_i32_1 = arith.constant 0 : i32
    return %c0_i32, %c0_i32_0 : i32, i32
  }
  func.func @transform_2(%arg0: i32) -> (i32, i32) {
    %c0_i32 = arith.constant 0 : i32
    %c0_i32_0 = arith.constant 0 : i32
    return %arg0, %c0_i32 : i32, i32
  }
}

</mosaic_0001>

<llo_original>
// kernel: tpu_custom_call.1
$region0: #{tpu_custom_call.1}
  #allocation0 [shape = 'u32[]', space=smem, size = 0x4, offset = 0x4, fixed_abs, tag = 'smem constant byte address 0x4 - core index']
  #allocation1 [shape = 'u32[144,128]{1,0:T(1,128)}', space=vmem, size = 0x12000, scoped, tag = 'internal scratch']
  %s0 = inlined_call_operand.vmem [shape: bf16[16,32], index: 0, kind: input, shape index: {}]
  %s1 = inlined_call_operand.vmem [shape: f32[128,32], index: 1, kind: input, shape index: {}]
  %s2 = inlined_call_operand.hbm [shape: bf16[16,128], index: 2, kind: output, shape index: {}]
  %s3 = sld [smem:[#allocation0]]
  $region18: #{tpu_custom_call.1} parent=0
    _
  %s5 = ssub.s32 1, %s3
  %s6 = scalar_select 0, %s5, %s3
  $region1: #{tpu_custom_call.1} parent=0
    #allocation2 [shape = 'u8[4096]{0}', space=vmem, size = 0x1000, scoped, tag = 'output window, operand 0, single buffered']
    #allocation3 [shape = 's32[1]{0}', space=sflag, size = 0x4, scoped, tag = 'scoped memory for tpu_custom_call.1']
    %7 = vsyncpa [#allocation3], 0
    // Predicated region
    $region2: #{tpu_custom_call.1} parent=1 // pred_check
      _
    $region3: #{tpu_custom_call.1} parent=1 // pred_check_branch
      %9 = sbr.rel (0) target = $region5
    $region4: #{tpu_custom_call.1} parent=1 // pred_region
      _
    $region5: #{tpu_custom_call.1} parent=1 // pred_fallthru
      _
    // Predicated region
    $region6: #{tpu_custom_call.1} parent=1 // pred_check
      _
    $region7: #{tpu_custom_call.1} parent=1 // pred_check_branch
      %11 = sbr.rel (0) target = $region9
    $region8: #{tpu_custom_call.1} parent=1 // pred_region
      _
    $region9: #{tpu_custom_call.1} parent=1 // pred_fallthru
      _
    %v12 = vld [vmem:[%s0] sm:$0xf]
    %v13 = vld [vmem:[%s0 + $0x4] sm:$0xf]
    %v14 = vunpack.c.l.bf16 %v12
    %v15 = vunpack.c.l.bf16 %v13
    %v16 = vld [vmem:[%s1] sm:$0xff]
    %v17 = vld [vmem:[%s1 + $0x8] sm:$0xff]
    %v18 = vld [vmem:[%s1 + $0x10] sm:$0xff]
    %v19 = vld [vmem:[%s1 + $0x18] sm:$0xff]
    %v20 = vld [vmem:[%s1 + $0x20] sm:$0xff]
    %v21 = vld [vmem:[%s1 + $0x28] sm:$0xff]
    %v22 = vld [vmem:[%s1 + $0x30] sm:$0xff]
    %v23 = vld [vmem:[%s1 + $0x38] sm:$0xff]
    %v24 = vld [vmem:[%s1 + $0x40] sm:$0xff]
    %v25 = vld [vmem:[%s1 + $0x48] sm:$0xff]
    %v26 = vld [vmem:[%s1 + $0x50] sm:$0xff]
    %v27 = vld [vmem:[%s1 + $0x58] sm:$0xff]
    %v28 = vld [vmem:[%s1 + $0x60] sm:$0xff]
    %v29 = vld [vmem:[%s1 + $0x68] sm:$0xff]
    %v30 = vld [vmem:[%s1 + $0x70] sm:$0xff]
    %v31 = vld [vmem:[%s1 + $0x78] sm:$0xff]
    %vm32 = vcmask 261120
    %v34 = vsel %vm32, %v14, 0
    %v37 = vsel %vm32, %v15, 0
    %v40 = vsel %vm32, %v16, 0
    %v43 = vsel %vm32, %v17, 0
    %v46 = vsel %vm32, %v18, 0
    %v49 = vsel %vm32, %v19, 0
    %v52 = vsel %vm32, %v20, 0
    %v55 = vsel %vm32, %v21, 0
    %v58 = vsel %vm32, %v22, 0
    %v61 = vsel %vm32, %v23, 0
    %v64 = vsel %vm32, %v24, 0
    %v67 = vsel %vm32, %v25, 0
    %v70 = vsel %vm32, %v26, 0
    %v73 = vsel %vm32, %v27, 0
    %v76 = vsel %vm32, %v28, 0
    %v79 = vsel %vm32, %v29, 0
    %v82 = vsel %vm32, %v30, 0
    %v85 = vsel %vm32, %v31, 0
    %87 = vmatprep.subr.mxu0 0.0
    %88 = vmatpush1.xpose.msra.mxu0 %v40
    %89 = vmatprep.subr.mxu0 0.0
    %90 = vmatpush1.xpose.msra.mxu0 %v43
    %91 = vmatprep.subr.mxu0 0.0
    %92 = vmatpush1.xpose.msra.mxu0 %v46
    %93 = vmatprep.subr.mxu0 0.0
    %94 = vmatpush1.xpose.msra.mxu0 %v49
    %95 = vmatprep.subr.mxu0 0.0
    %96 = vmatpush1.xpose.msra.mxu0 %v52
    %97 = vmatprep.subr.mxu0 0.0
    %98 = vmatpush1.xpose.msra.mxu0 %v55
    %99 = vmatprep.subr.mxu0 0.0
    %100 = vmatpush1.xpose.msra.mxu0 %v58
    %101 = vmatprep.subr.mxu0 0.0
    %102 = vmatpush1.xpose.msra.mxu0 %v61
    %103 = vmatprep.subr.mxu0 0.0
    %104 = vmatpush1.xpose.msra.mxu0 %v64
    %105 = vmatprep.subr.mxu0 0.0
    %106 = vmatpush1.xpose.msra.mxu0 %v67
    %107 = vmatprep.subr.mxu0 0.0
    %108 = vmatpush1.xpose.msra.mxu0 %v70
    %109 = vmatprep.subr.mxu0 0.0
    %110 = vmatpush1.xpose.msra.mxu0 %v73
    %111 = vmatprep.subr.mxu0 0.0
    %112 = vmatpush1.xpose.msra.mxu0 %v76
    %113 = vmatprep.subr.mxu0 0.0
    %114 = vmatpush1.xpose.msra.mxu0 %v79
    %115 = vmatprep.subr.mxu0 0.0
    %116 = vmatpush1.xpose.msra.mxu0 %v82
    %117 = vmatprep.subr.mxu0 0.0
    %118 = vmatpush1.xpose.msra.mxu0 %v85
    %119 = vmatprep.subr.mxu0 0.0
    %120 = vmatpush1.xpose.msra.mxu0 0.0
    %121 = vmatprep.subr.mxu0 0.0
    %122 = vmatpush1.xpose.msra.mxu0 0.0
    %123 = vmatprep.subr.mxu0 0.0
    %124 = vmatpush1.xpose.msra.mxu0 0.0
    %125 = vmatprep.subr.mxu0 0.0
    %126 = vmatpush1.xpose.msra.mxu0 0.0
    %127 = vmatprep.subr.mxu0 0.0
    %128 = vmatpush1.xpose.msra.mxu0 0.0
    %129 = vmatprep.subr.mxu0 0.0
    %130 = vmatpush1.xpose.msra.mxu0 0.0
    %131 = vmatprep.subr.mxu0 0.0
    %132 = vmatpush1.xpose.msra.mxu0 0.0
    %133 = vmatprep.subr.mxu0 0.0
    %134 = vmatpush1.xpose.msra.mxu0 0.0
    %135 = vmatprep.subr.mxu0 0.0
    %136 = vmatpush1.xpose.msra.mxu0 0.0
    %137 = vmatprep.subr.mxu0 0.0
    %138 = vmatpush1.xpose.msra.mxu0 0.0
    %139 = vmatprep.subr.mxu0 0.0
    %140 = vmatpush1.xpose.msra.mxu0 0.0
    %141 = vmatprep.subr.mxu0 0.0
    %142 = vmatpush1.xpose.msra.mxu0 0.0
    %143 = vmatprep.subr.mxu0 0.0
    %144 = vmatpush1.xpose.msra.mxu0 0.0
    %145 = vmatprep.subr.mxu0 0.0
    %146 = vmatpush1.xpose.msra.mxu0 0.0
    %147 = vmatprep.subr.mxu0 0.0
    %148 = vmatpush1.xpose.msra.mxu0 0.0
    %149 = vmatprep.subr.mxu0 0.0
    %150 = vmatpush1.xpose.msra.mxu0 0.0
    %151 = vmatprep.mubr.f32.mxu0 0.0
    %152 = vmatmul.mubr.f32.gmra.mrb[0].mxu0 %v34
    %v153 = vpop.f32.mrb[0].mxu0
    %v154 = vadd.f32 0.0, %v153
    %v155 = vpop.f32.mrb[0].mxu0
    %156 = vmatprep.mubr.f32.mxu0 0.0
    %157 = vmatmul.mubr.f32.gmra.mrb[0].mxu0 %v37
    %v158 = vpop.f32.mrb[0].mxu0
    %v159 = vadd.f32 0.0, %v158
    %v160 = vpop.f32.mrb[0].mxu0
    %161 = vdwg.mxu0
    %v162 = vpack.c.bf16 %v159, %v154
    %v164 = vunpack.c.l.b16 %v162
    %v165 = vunpack.c.h.b16 %v162
    %v166 = vpack.c.b16 %v164, %v164
    %v167 = vpack.c.b16 %v165, %v165
    %170 = vst [vmem:[#allocation2] sm:$0xf] %v166
    %171 = vst [vmem:[#allocation2 + $0x4] sm:$0xf] %v167
    // Predicated region
    $region10: #{tpu_custom_call.1} parent=1 // pred_check
      _
    $region11: #{tpu_custom_call.1} parent=1 // pred_check_branch
      %173 = sbr.rel (0) target = $region13
    $region12: #{tpu_custom_call.1} parent=1 // pred_region
      %s175 = ssub.s32 128, 128
      %176 = vsyncadd [#allocation3], %s175
      %s177 = sshll.u32 [#allocation2], 4
      %s178 = int_to_ptr.vmem [resolvable:$true] %s177
      %183 = dma.vmem_to_hbm [thread:$0]  %s178, 128, %s2, [#allocation3], 64, 64, 4
    $region13: #{tpu_custom_call.1} parent=1 // pred_fallthru
      _
    // Predicated region
    $region14: #{tpu_custom_call.1} parent=1 // pred_check
      _
    $region15: #{tpu_custom_call.1} parent=1 // pred_check_branch
      %185 = sbr.rel (0) target = $region17
    $region16: #{tpu_custom_call.1} parent=1 // pred_region
      %186 = dma.done [#allocation3], 128
    $region17: #{tpu_custom_call.1} parent=1 // pred_fallthru
      _
    %187 = vsyncpa [#allocation3], 1

</llo_original>
